<compile_context>
chip_gen: v7x
topology: tpu7x:2x2x1
jax: 0.10.0
libtpu: 0.0.40
codegen_flags: <defaults>
</compile_context>

<pallas_src>
import functools

import jax
import jax.numpy as jnp
from jax.experimental import pallas as pl
from jax.experimental.pallas import tpu as pltpu


def _round_up(x, m):
    return (x + m - 1) // m * m


def _maxpool1d_kernel(xs_ref, o_ref, *, kernel_size, stride, dilation, w_out):
    # xs_ref: [stride, R, wq]  (phase, rows, phase-width), o_ref: [R, w_out]
    # Tap k lives in phase q = (k*dilation) % stride at lane offset
    # p0 = (k*dilation) // stride; all slices static & lane-contiguous.
    acc = xs_ref[0, :, 0:w_out]                       # tap k = 0 initializes acc
    for k in range(1, kernel_size):
        off = k * dilation
        q, p0 = off % stride, off // stride
        acc = jnp.maximum(acc, xs_ref[q, :, p0:p0 + w_out])
    o_ref[...] = acc


def maxpool1d_pallas(x, kernel_size, stride=None, padding=0, dilation=1):
    """Replicates torch.nn.MaxPool1d(kernel_size, stride, padding, dilation)."""
    stride = kernel_size if stride is None else stride
    assert x.ndim == 3, "expected (N, C, W)"
    n, c, w = x.shape
    dtype = x.dtype
    assert jnp.issubdtype(dtype, jnp.floating)

    w_out = (w + 2 * padding - dilation * (kernel_size - 1) - 1) // stride + 1
    assert w_out > 0
    # PyTorch-style constraint: every window overlaps >=1 valid element, so padding
    # with the dtype's most-negative finite value matches the CUDA -FLT_MAX init.
    assert 2 * padding <= dilation * (kernel_size - 1) + 1

    neg = float(jnp.finfo(dtype).min)   # -FLT_MAX for f32 (plain python float)
    rows = n * c

    # Phase-split geometry.
    p0_max = ((kernel_size - 1) * dilation) // stride
    wq = _round_up(max(p0_max + w_out, -(-(padding + w) // stride)), 128)
    w_big = wq * stride
    assert w_big >= padding + w, (w_big, padding, w)

    # VMEM-aware row tile (multiple of 8); prefer >=2 grid steps for megacore.
    elt = jnp.dtype(dtype).itemsize
    bytes_per_row = (stride * wq + w_out) * elt * 2        # double-buffered in + out
    vmem_budget = 8 * 1024 * 1024                          # safe on v5e/v6e/v7x
    r_budget = min(2048, max(8, (vmem_budget // bytes_per_row) // 8 * 8))
    r_half = _round_up(max(-(-rows // 2), 1), 8)
    row_tile = max(8, min(r_budget, r_half))
    rows_p = _round_up(rows, row_tile)

    # Single fused prep pass: pad rows -> rows_p and width -> w_big with `neg`,
    # then (free) reshape + one transpose into phase-major layout.
    x2 = x.reshape(rows, w)
    buf = jnp.pad(x2, ((0, rows_p - rows), (padding, w_big - padding - w)),
                  constant_values=neg)
    x_strided = buf.reshape(rows_p, wq, stride).transpose(2, 0, 1)  # [stride, rows_p, wq]

    kernel = functools.partial(
        _maxpool1d_kernel,
        kernel_size=kernel_size, stride=stride, dilation=dilation, w_out=w_out,
    )

    out = pl.pallas_call(
        kernel,
        out_shape=jax.ShapeDtypeStruct((rows_p, w_out), dtype),
        grid_spec=pltpu.PrefetchScalarGridSpec(
            num_scalar_prefetch=0,
            grid=(rows_p // row_tile,),
            in_specs=[pl.BlockSpec((stride, row_tile, wq), lambda i: (0, i, 0))],
            out_specs=pl.BlockSpec((row_tile, w_out), lambda i: (i, 0)),
        ),
        compiler_params=pltpu.CompilerParams(
            dimension_semantics=("parallel",),
            vmem_limit_bytes=32 * 1024 * 1024,
        ),
    )(x_strided)

    return out[:rows].reshape(n, c, w_out)


def maxpool1d_ref(x, kernel_size, stride=None, padding=0, dilation=1):
    """Pure-JAX reference (same semantics as nn.MaxPool1d)."""
    stride = kernel_size if stride is None else stride
    n, c, w = x.shape
    w_out = (w + 2 * padding - dilation * (kernel_size - 1) - 1) // stride + 1
    neg = float(jnp.finfo(x.dtype).min)
    xp = jnp.pad(x, ((0, 0), (0, 0), (padding, padding)), constant_values=neg)
    taps = []
    for k in range(kernel_size):
        start = k * dilation
        taps.append(jax.lax.slice_in_dim(
            xp, start, start + (w_out - 1) * stride + 1, stride, axis=2))
    return jnp.max(jnp.stack(taps, axis=0), axis=0)


if __name__ == "__main__":
    # Model(kernel_size=4, stride=2, padding=2, dilation=3) — the specialized case.
    KERNEL_SIZE, STRIDE, PADDING, DILATION = 4, 2, 2, 3

    key = jax.random.PRNGKey(0)
    N, C, W = 2, 4, 128  # small NCW input
    x = jax.random.normal(key, (N, C, W), dtype=jnp.float32)

    out = maxpool1d_pallas(x, KERNEL_SIZE, STRIDE, PADDING, DILATION)
    out = jax.block_until_ready(out)

    ref = maxpool1d_ref(x, KERNEL_SIZE, STRIDE, PADDING, DILATION)
    assert out.shape == ref.shape, (out.shape, ref.shape)
    assert jnp.allclose(out, ref, atol=0, rtol=0), "mismatch vs reference"

    print("KERNEL_OK")
</pallas_src>

<mosaic_0001>
module attributes {stable_mosaic.version = 11 : i64} {
  func.func @_maxpool1d_kernel(%arg0: i32, %arg1: memref<2x8x128xf32, #tpu.memory_space<vmem>>, %arg2: memref<8x62xf32, #tpu.memory_space<vmem>>) attributes {dimension_semantics = [#tpu.dimension_semantics<parallel>], iteration_bounds = array<i64: 1>, scalar_prefetch = 0 : i64, scratch_operands = 0 : i64, tpu.core_type = #tpu.core_type<tc>, window_params = [{transform_indices = @transform_0, window_bounds = array<i64: 2, 8, 128>}, {transform_indices = @transform_1, window_bounds = array<i64: 8, 62>}]} {
    %c0 = arith.constant 0 : index
    %c0_0 = arith.constant 0 : index
    %c0_1 = arith.constant 0 : index
    %0 = vector.load %arg1[%c0, %c0_0, %c0_1] : memref<2x8x128xf32, #tpu.memory_space<vmem>>, vector<1x8x62xf32>
    %1 = vector.shape_cast %0 : vector<1x8x62xf32> to vector<8x62xf32>
    %c1 = arith.constant 1 : index
    %c0_2 = arith.constant 0 : index
    %c1_3 = arith.constant 1 : index
    %2 = vector.load %arg1[%c1, %c0_2, %c1_3] : memref<2x8x128xf32, #tpu.memory_space<vmem>>, vector<1x8x62xf32>
    %3 = vector.shape_cast %2 : vector<1x8x62xf32> to vector<8x62xf32>
    %4 = arith.maximumf %1, %3 : vector<8x62xf32>
    %c0_4 = arith.constant 0 : index
    %c0_5 = arith.constant 0 : index
    %c3 = arith.constant 3 : index
    %5 = vector.load %arg1[%c0_4, %c0_5, %c3] : memref<2x8x128xf32, #tpu.memory_space<vmem>>, vector<1x8x62xf32>
    %6 = vector.shape_cast %5 : vector<1x8x62xf32> to vector<8x62xf32>
    %7 = arith.maximumf %4, %6 : vector<8x62xf32>
    %c1_6 = arith.constant 1 : index
    %c0_7 = arith.constant 0 : index
    %c4 = arith.constant 4 : index
    %8 = vector.load %arg1[%c1_6, %c0_7, %c4] : memref<2x8x128xf32, #tpu.memory_space<vmem>>, vector<1x8x62xf32>
    %9 = vector.shape_cast %8 : vector<1x8x62xf32> to vector<8x62xf32>
    %10 = arith.maximumf %7, %9 : vector<8x62xf32>
    %c0_8 = arith.constant 0 : index
    %c0_9 = arith.constant 0 : index
    %11 = vector.load %arg2[%c0_8, %c0_9] : memref<8x62xf32, #tpu.memory_space<vmem>>, vector<8x62xf32>
    tpu.vector_store %arg2[%c0_8, %c0_9], %10 {strides = array<i32>} : memref<8x62xf32, #tpu.memory_space<vmem>>, vector<8x62xf32>,
    return
  }
  func.func @transform_0(%arg0: i32) -> (i32, i32, i32) {
    %c0_i32 = arith.constant 0 : i32
    %c0_i32_0 = arith.constant 0 : i32
    %c0_i32_1 = arith.constant 0 : i32
    return %c0_i32, %arg0, %c0_i32_0 : i32, i32, i32
  }
  func.func @transform_1(%arg0: i32) -> (i32, i32) {
    %c0_i32 = arith.constant 0 : i32
    %c0_i32_0 = arith.constant 0 : i32
    return %arg0, %c0_i32 : i32, i32
  }
}

</mosaic_0001>

<llo_original>
// kernel: tpu_custom_call.1
$region0: #{tpu_custom_call.1}
  #allocation0 [shape = 'u32[]', space=smem, size = 0x4, offset = 0x4, fixed_abs, tag = 'smem constant byte address 0x4 - core index']
  #allocation1 [shape = 'u32[144,128]{1,0:T(1,128)}', space=vmem, size = 0x12000, scoped, tag = 'internal scratch']
  %s0 = inlined_call_operand.hbm [shape: f32[2,8,128], index: 0, kind: input, shape index: {}]
  %s1 = inlined_call_operand.hbm [shape: f32[8,62], index: 1, kind: output, shape index: {}]
  %s2 = sld [smem:[#allocation0]]
  $region18: #{tpu_custom_call.1} parent=0
    _
  %s4 = ssub.s32 1, %s2
  %s5 = scalar_select 0, %s4, %s2
  $region1: #{tpu_custom_call.1} parent=0
    #allocation2 [shape = 'u8[8192]{0}', space=vmem, size = 0x2000, scoped, tag = 'input window, operand 0, single buffered']
    #allocation3 [shape = 's32[1]{0}', space=sflag, size = 0x4, scoped, tag = 'scoped memory for tpu_custom_call.1']
    #allocation4 [shape = 's32[1]{0}', space=sflag, size = 0x4, scoped, tag = 'scoped memory for tpu_custom_call.1']
    #allocation5 [shape = 'u8[4096]{0}', space=vmem, size = 0x1000, scoped, tag = 'output window, operand 0, single buffered']
    %6 = vsyncpa [#allocation3], 0
    %7 = vsyncpa [#allocation4], 0
    // Predicated region
    $region2: #{tpu_custom_call.1} parent=1 // pred_check
      _
    $region3: #{tpu_custom_call.1} parent=1 // pred_check_branch
      %9 = sbr.rel (0) target = $region5
    $region4: #{tpu_custom_call.1} parent=1 // pred_region
      %s11 = ssub.s32 256, 256
      %12 = vsyncadd [#allocation3], %s11
      %s13 = sshll.u32 [#allocation2], 4
      %s14 = int_to_ptr.vmem [resolvable:$true] %s13
      %19 = dma.hbm_to_vmem [thread:$0]  %s0, 256, %s14, [#allocation3], 128, 128, 8
    $region5: #{tpu_custom_call.1} parent=1 // pred_fallthru
      _
    // Predicated region
    $region6: #{tpu_custom_call.1} parent=1 // pred_check
      _
    $region7: #{tpu_custom_call.1} parent=1 // pred_check_branch
      %21 = sbr.rel (0) target = $region9
    $region8: #{tpu_custom_call.1} parent=1 // pred_region
      %22 = dma.done [#allocation3], 256
    $region9: #{tpu_custom_call.1} parent=1 // pred_fallthru
      _
    %v23 = vld [vmem:[#allocation2] sm:$0xff]
    %s24 = scalar_lea.vmem [#allocation2], 8
    %v25 = vld [vmem:[%s24] sm:$0xff]
    %27 = vrot.lane.b32.xlu0 %v25, 127
    %v28 = vpop.permute.xlu0 %27
    %v30 = vmax.f32 %v23, %v28
    %32 = vrot.lane.b32.xlu0 %v23, 125
    %v33 = vpop.permute.xlu0 %32
    %v35 = vmax.f32 %v30, %v33
    %36 = vrot.lane.b32.xlu0 %v25, 124
    %v37 = vpop.permute.xlu0 %36
    %v39 = vmax.f32 %v35, %v37
    %vm40 = vcmask 506880
    %41 = vst.msk [vmem:[#allocation5] sm:$0xff] %vm40, %v39
    // Predicated region
    $region10: #{tpu_custom_call.1} parent=1 // pred_check
      _
    $region11: #{tpu_custom_call.1} parent=1 // pred_check_branch
      %43 = sbr.rel (0) target = $region13
    $region12: #{tpu_custom_call.1} parent=1 // pred_region
      %s45 = ssub.s32 128, 128
      %46 = vsyncadd [#allocation4], %s45
      %s48 = sshll.u32 [#allocation5], 4
      %s49 = int_to_ptr.vmem [resolvable:$true] %s48
      %51 = dma.vmem_to_hbm [thread:$0]  %s49, 128, %s1, [#allocation4]
    $region13: #{tpu_custom_call.1} parent=1 // pred_fallthru
      _
    // Predicated region
    $region14: #{tpu_custom_call.1} parent=1 // pred_check
      _
    $region15: #{tpu_custom_call.1} parent=1 // pred_check_branch
      %53 = sbr.rel (0) target = $region17
    $region16: #{tpu_custom_call.1} parent=1 // pred_region
      %54 = dma.done [#allocation4], 128
    $region17: #{tpu_custom_call.1} parent=1 // pred_fallthru
      _
    %55 = vsyncpa [#allocation3], 1
    %56 = vsyncpa [#allocation4], 1

</llo_original>
